<compile_context>
chip_gen: v5e
topology: v5e:2x2
jax: 0.10.0
libtpu: 0.0.40
codegen_flags: <defaults>
</compile_context>

<pallas_src>
import functools

import numpy as np

import jax
import jax.numpy as jnp
from jax import lax
from jax.experimental import pallas as pl
from jax.experimental.pallas import tpu as pltpu


# ----------------------------------------------------------------------------
# Host-side (static) interpolation-weight construction.
# ----------------------------------------------------------------------------
def _bilinear_weights(in_size: int, out_size: int, antialias: bool) -> np.ndarray:
    """Row-stochastic (out_size, in_size) bilinear interpolation matrix.

    Matches aten's upsample_bilinear2d (align_corners=False) and
    upsample_bilinear2d_aa (antialias=True) weight computation.
    """
    w = np.zeros((out_size, in_size), dtype=np.float64)
    scale = in_size / out_size
    if antialias:
        support = scale if scale >= 1.0 else 1.0
        invscale = (1.0 / scale) if scale >= 1.0 else 1.0
        for i in range(out_size):
            center = scale * (i + 0.5)
            xmin = max(int(center - support + 0.5), 0)
            xmax = min(int(center + support + 0.5), in_size)
            taps = np.arange(xmin, xmax, dtype=np.float64)
            ws = np.maximum(0.0, 1.0 - np.abs((taps - center + 0.5) * invscale))
            total = ws.sum()
            if total > 0.0:
                ws = ws / total
            w[i, xmin:xmax] = ws
    else:
        for i in range(out_size):
            src = max(scale * (i + 0.5) - 0.5, 0.0)
            i0 = int(np.floor(src))
            lam = src - i0
            i0c = min(i0, in_size - 1)
            i1c = min(i0 + 1, in_size - 1)
            w[i, i0c] += 1.0 - lam
            w[i, i1c] += lam
    return w.astype(np.float32)


def _compute_output_size(h: int, w: int, size, max_size):
    """torchvision._compute_resized_output_size semantics (static Python)."""
    if isinstance(size, (list, tuple)) and len(size) == 2:
        if max_size is not None:
            raise ValueError("max_size is only supported when size is an int")
        return int(size[0]), int(size[1])
    if isinstance(size, (list, tuple)):
        size = size[0]
    size = int(size)
    short, long = (w, h) if w <= h else (h, w)
    new_short, new_long = size, int(size * long / short)
    if max_size is not None:
        if max_size <= size:
            raise ValueError("max_size must be strictly greater than size")
        if new_long > max_size:
            new_short, new_long = int(max_size * new_short / new_long), max_size
    new_w, new_h = (new_short, new_long) if w <= h else (new_long, new_short)
    return new_h, new_w


# ----------------------------------------------------------------------------
# Generation-aware VMEM budgeting.
# ----------------------------------------------------------------------------
def _vmem_budget():
    cap = 128 * 1024 * 1024
    try:
        info = pltpu.get_tpu_info()
        cap = int(getattr(info, "vmem_capacity_bytes", cap))
    except Exception:
        cap = 64 * 1024 * 1024          # conservative (v7x-sized) fallback
    budget = cap // 5                   # target per-grid-step working set
    limit = (cap * 3) // 4              # scoped VMEM limit requested from Mosaic
    return budget, limit


def _plan(L, Hi, Wi, Ho, Wo, in_bytes, out_bytes, c_bytes):
    """Choose (bc, tho, h_first, vmem_limit).

    bc  = number of image planes per grid step along the fused leading dim.
    tho = output-row block (== Ho unless a single plane overflows the budget).
    """
    budget, vmem_limit = _vmem_budget()

    # Pass-order choice by per-plane MXU FLOPs (MAC counts; factor 2 irrelevant).
    flops_w_first = Hi * Wi * Wo + Ho * Hi * Wo
    flops_h_first = Ho * Hi * Wi + Ho * Wi * Wo
    h_first = flops_h_first <= flops_w_first

    # ---- Normal path: full-Ho blocks, as many planes per step as fit. -------
    inter_plane = (Ho * Wi) if h_first else (Hi * Wo)          # VMEM intermediate
    per_plane = (2 * Hi * Wi * in_bytes        # double-buffered input
                 + 2 * Ho * Wo * out_bytes     # double-buffered output
                 + inter_plane * c_bytes)      # scratch (single-buffered)
    fixed = 2 * (Ho * Hi + Wi * Wo) * c_bytes  # weight tiles
    avail = budget - fixed
    bc_max = avail // per_plane if avail > 0 else 0
    bc_max = int(min(bc_max, L))

    if bc_max >= 1:
        # Keep >= ~4 grid steps on the parallel axis when possible (megacore
        # sharding on v7x + pipeline depth); harmless on v5e/v6e.
        target_steps = min(L, 4)
        bc = max(1, min(bc_max, L // target_steps))
        return bc, Ho, h_first, vmem_limit

    # ---- Fallback: one plane per step is still too big -> block output rows.
    # Force H-first so the W pass is never recomputed across row blocks.
    # TODO(synk): truly huge planes (e.g. 4K+ f32) would additionally need
    # input Hi/Wi tiling; not implemented.
    h_first = True
    fixed1 = 2 * Hi * Wi * in_bytes + 2 * Wi * Wo * c_bytes
    per_row = 2 * Wo * out_bytes + Wi * c_bytes + 2 * Hi * c_bytes
    avail1 = max(budget - fixed1, budget // 4)
    tho = int(avail1 // per_row)
    tho = max(8, (tho // 8) * 8)        # (8,128) rule on the blocked sublane dim
    tho = min(tho, Ho)
    if Ho < 8:
        tho = Ho                        # full-extent block is always legal
    return 1, tho, h_first, vmem_limit


# ----------------------------------------------------------------------------
# Pallas kernel.
#   x_ref : (bc, Hi, Wi)   image planes (input dtype)
#   wh_ref: (tho, Hi)      row-interp weights block (compute dtype)
#   ww_ref: (Wi, Wo)       col-interp weights       (compute dtype)
#   o_ref : (bc, tho, Wo)  output planes (output dtype)
#   y_ref : VMEM scratch for the intermediate (compute dtype)
# ----------------------------------------------------------------------------
def _resize_kernel(x_ref, wh_ref, ww_ref, o_ref, y_ref, *,
                   h_first, merge_ok, cdt, round_int, out_lo, out_hi):
    wh = wh_ref[...]                    # VMEM-resident across grid steps
    ww = ww_ref[...]
    bc = x_ref.shape[0]
    wo = ww.shape[1]
    unroll = bc <= 8

    def finish(v):                      # f32 -> output dtype (+ int round/clamp)
        if round_int:
            v = jnp.clip(jnp.round(v), out_lo, out_hi)
        return v.astype(o_ref.dtype)

    if not merge_ok:
        # Safe fallback for awkward (non multiple-of-8) merge dims: both passes
        # per plane.  Pass order still chosen by FLOPs.
        def body(b, carry):
            xb = x_ref[b].astype(cdt)
            if h_first:
                t = jnp.dot(wh, xb, preferred_element_type=jnp.float32).astype(cdt)
                o = jnp.dot(t, ww, preferred_element_type=jnp.float32)
            else:
                t = jnp.dot(xb, ww, preferred_element_type=jnp.float32).astype(cdt)
                o = jnp.dot(wh, t, preferred_element_type=jnp.float32)
            o_ref[b] = finish(o)
            return carry
        lax.fori_loop(0, bc, body, 0, unroll=unroll)
        return

    if h_first:
        # Pass 1 (rows): per-plane  y[b] = Wh_blk @ x[b]  -> (tho, Wi)
        tho = wh.shape[0]

        def body(b, carry):
            y_ref[b] = jnp.dot(wh, x_ref[b].astype(cdt),
                               preferred_element_type=jnp.float32).astype(cdt)
            return carry
        lax.fori_loop(0, bc, body, 0, unroll=unroll)

        # Pass 2 (cols): ONE big MXU matmul over all planes (M = bc*tho).
        y2 = y_ref[...].reshape(bc * tho, y_ref.shape[2])
        o = jnp.dot(y2, ww, preferred_element_type=jnp.float32)
        o_ref[...] = finish(o.reshape(bc, tho, wo))
    else:
        # Pass 1 (cols): ONE big MXU matmul over all planes (M = bc*Hi).
        hi, wi = x_ref.shape[1], x_ref.shape[2]
        x2 = x_ref[...].astype(cdt).reshape(bc * hi, wi)
        y_ref[...] = jnp.dot(x2, ww, preferred_element_type=jnp.float32
                             ).astype(cdt).reshape(bc, hi, wo)

        # Pass 2 (rows): per-plane  out[b] = Wh @ y[b].
        def body(b, carry):
            o_ref[b] = finish(jnp.dot(wh, y_ref[b],
                                      preferred_element_type=jnp.float32))
            return carry
        lax.fori_loop(0, bc, body, 0, unroll=unroll)


# ----------------------------------------------------------------------------
# Wrapper: matches Resize(size, BILINEAR, max_size, antialias).forward(img).
# ----------------------------------------------------------------------------
def resize(img_tuple, size, max_size=None, antialias=True):
    image, aux = img_tuple
    # TODO(synk): only InterpolationMode.BILINEAR is implemented; NEAREST /
    # BICUBIC / BOX / HAMMING / LANCZOS and the PIL-image branch are not.
    *lead, Hi, Wi = image.shape
    Ho, Wo = _compute_output_size(Hi, Wi, size, max_size)

    L = 1
    for d in lead:
        L *= int(d)
    x3 = image.reshape((L, Hi, Wi))

    # Compute dtype: keep bf16 native on the MXU (f32 accumulate); f32 else.
    cdt = jnp.bfloat16 if image.dtype == jnp.bfloat16 else jnp.float32
    round_int = bool(jnp.issubdtype(image.dtype, jnp.integer))
    if round_int:
        ii = jnp.iinfo(image.dtype)
        out_lo, out_hi = float(ii.min), float(ii.max)
    else:
        out_lo = out_hi = 0.0

    in_b = int(jnp.dtype(image.dtype).itemsize)
    out_b = in_b
    c_b = int(jnp.dtype(cdt).itemsize)

    bc, tho, h_first, vmem_limit = _plan(L, Hi, Wi, Ho, Wo, in_b, out_b, c_b)

    # Reshape-merge of the plane dim into the matmul M dim is layout-cheap only
    # when the merged sublane extent is a multiple of 8 (or bc == 1).
    merge_dim = tho if h_first else Hi
    merge_ok = (bc == 1) or (merge_dim % 8 == 0)

    wh = jnp.asarray(_bilinear_weights(Hi, Ho, antialias), dtype=cdt)      # (Ho, Hi)
    ww = jnp.asarray(_bilinear_weights(Wi, Wo, antialias).T, dtype=cdt)    # (Wi, Wo)

    grid = (pl.cdiv(L, bc), pl.cdiv(Ho, tho))
    scratch_shape = (bc, tho, Wi) if h_first else (bc, Hi, Wo)

    flops_plane = 2 * ((Ho * Hi * Wi + Ho * Wi * Wo) if h_first
                       else (Hi * Wi * Wo + Ho * Hi * Wo))
    cost = pl.CostEstimate(
        flops=int(L * flops_plane),
        transcendentals=0,
        bytes_accessed=int(L * Hi * Wi * in_b + L * Ho * Wo * out_b
                           + (Ho * Hi + Wi * Wo) * c_b),
    )

    kernel = functools.partial(
        _resize_kernel, h_first=h_first, merge_ok=merge_ok, cdt=cdt,
        round_int=round_int, out_lo=out_lo, out_hi=out_hi)

    out3 = pl.pallas_call(
        kernel,
        out_shape=jax.ShapeDtypeStruct((L, Ho, Wo), image.dtype),
        grid=grid,
        in_specs=[
            pl.BlockSpec((bc, Hi, Wi), lambda i, j: (i, 0, 0)),
            pl.BlockSpec((tho, Hi), lambda i, j: (j, 0)),     # resident across i
            pl.BlockSpec((Wi, Wo), lambda i, j: (0, 0)),      # DMA'd once
        ],
        out_specs=pl.BlockSpec((bc, tho, Wo), lambda i, j: (i, j, 0)),
        scratch_shapes=[pltpu.VMEM(scratch_shape, cdt)],
        compiler_params=pltpu.CompilerParams(
            dimension_semantics=("parallel", "arbitrary"),
            vmem_limit_bytes=int(vmem_limit),
        ),
        cost_estimate=cost,
    )(x3, wh, ww)

    out = out3.reshape(tuple(lead) + (Ho, Wo))
    # aux element of the tuple is passed through untouched.
    return out, aux


if __name__ == "__main__":
    key = jax.random.PRNGKey(0)
    k_img, k_aux = jax.random.split(key)

    # Small deterministic inputs: NCHW image (values in [0,1)) + aux tensor.
    image = jax.random.uniform(k_img, (2, 4, 16, 16), dtype=jnp.float32)
    aux = jax.random.randint(k_aux, (2,), 0, 10, dtype=jnp.int32)

    # Downscale with tuple size (antialias=True, the module default).
    out_img, out_aux = resize((image, aux), size=(8, 8), antialias=True)
    jax.block_until_ready(out_img)
    jax.block_until_ready(out_aux)
    assert out_img.shape == (2, 4, 8, 8)

    # Plain-JAX reference using the same separable weights.
    wh_ref = jnp.asarray(_bilinear_weights(16, 8, True))        # (8, 16)
    ww_ref = jnp.asarray(_bilinear_weights(16, 8, True).T)      # (16, 8)
    ref = jnp.einsum(
        "oh,nchw,wv->ncov", wh_ref, image, ww_ref,
        precision=jax.lax.Precision.HIGHEST,
    )
    # Tolerance covers MXU input-precision (bf16-pass) effects on f32 matmuls;
    # genuine indexing / normalization bugs produce O(0.3) errors on [0,1) data.
    assert jnp.allclose(out_img, ref, atol=2e-2, rtol=2e-2), "mismatch vs. reference"
    assert jnp.array_equal(out_aux, aux), "aux element must be passed through"

    # Int-size (smaller-edge) path with an upscale.
    out2, _ = resize((image, aux), size=24, antialias=True)
    jax.block_until_ready(out2)
    assert out2.shape == (2, 4, 24, 24)

    # bf16 path (no f32 upcast inside the kernel), antialias=False branch.
    out3, _ = resize((image.astype(jnp.bfloat16), aux), size=(8, 8), antialias=False)
    jax.block_until_ready(out3)
    assert out3.shape == (2, 4, 8, 8)
    assert out3.dtype == jnp.bfloat16

    print("KERNEL_OK")
</pallas_src>

<mosaic_0001>
module attributes {stable_mosaic.version = 11 : i64} {
  func.func @_resize_kernel(%arg0: i32, %arg1: i32, %arg2: memref<2x16x16xf32, #tpu.memory_space<vmem>>, %arg3: memref<8x16xf32, #tpu.memory_space<vmem>>, %arg4: memref<16x8xf32, #tpu.memory_space<vmem>>, %arg5: memref<2x8x8xf32, #tpu.memory_space<vmem>>, %arg6: memref<2x8x16xf32, #tpu.memory_space<vmem>>) attributes {dimension_semantics = [#tpu.dimension_semantics<parallel>, #tpu.dimension_semantics<arbitrary>], iteration_bounds = array<i64: 4, 1>, scalar_prefetch = 0 : i64, scratch_operands = 1 : i64, tpu.core_type = #tpu.core_type<tc>, window_params = [{transform_indices = @transform_0, window_bounds = array<i64: 2, 16, 16>}, {transform_indices = @transform_1, window_bounds = array<i64: 8, 16>}, {pipeline_mode = #tpu.pipeline_mode<synchronous>, transform_indices = @transform_2, window_bounds = array<i64: 16, 8>}, {transform_indices = @transform_3, window_bounds = array<i64: 2, 8, 8>}]} {
    %c0 = arith.constant 0 : index
    %c0_0 = arith.constant 0 : index
    %0 = vector.load %arg3[%c0, %c0_0] : memref<8x16xf32, #tpu.memory_space<vmem>>, vector<8x16xf32>
    %c0_1 = arith.constant 0 : index
    %c0_2 = arith.constant 0 : index
    %1 = vector.load %arg4[%c0_1, %c0_2] : memref<16x8xf32, #tpu.memory_space<vmem>>, vector<16x8xf32>
    %c0_i32 = arith.constant 0 : i32
    %2 = arith.index_cast %c0_i32 : i32 to index
    %c0_3 = arith.constant 0 : index
    %c0_4 = arith.constant 0 : index
    %3 = vector.load %arg2[%2, %c0_3, %c0_4] : memref<2x16x16xf32, #tpu.memory_space<vmem>>, vector<1x16x16xf32>
    %4 = vector.shape_cast %3 : vector<1x16x16xf32> to vector<16x16xf32>
    %cst = arith.constant dense<0.000000e+00> : vector<8x16xf32>
    %5 = tpu.matmul %0, %4, %cst {dimension_numbers = #tpu.dot_dimension_numbers<[1], [0], [0], [1], [0, 0, 1, 1], [], []>} : vector<8x16xf32>, vector<16x16xf32>, vector<8x16xf32> -> vector<8x16xf32>
    %6 = arith.index_cast %c0_i32 : i32 to index
    %c0_5 = arith.constant 0 : index
    %c0_6 = arith.constant 0 : index
    %7 = vector.load %arg6[%6, %c0_5, %c0_6] : memref<2x8x16xf32, #tpu.memory_space<vmem>>, vector<1x8x16xf32>
    %8 = vector.shape_cast %7 : vector<1x8x16xf32> to vector<8x16xf32>
    %9 = vector.shape_cast %5 : vector<8x16xf32> to vector<1x8x16xf32>
    tpu.vector_store %arg6[%6, %c0_5, %c0_6], %9 {strides = array<i32>} : memref<2x8x16xf32, #tpu.memory_space<vmem>>, vector<1x8x16xf32>,
    %c1_i32 = arith.constant 1 : i32
    %10 = arith.index_cast %c1_i32 : i32 to index
    %c0_7 = arith.constant 0 : index
    %c0_8 = arith.constant 0 : index
    %11 = vector.load %arg2[%10, %c0_7, %c0_8] : memref<2x16x16xf32, #tpu.memory_space<vmem>>, vector<1x16x16xf32>
    %12 = vector.shape_cast %11 : vector<1x16x16xf32> to vector<16x16xf32>
    %cst_9 = arith.constant dense<0.000000e+00> : vector<8x16xf32>
    %13 = tpu.matmul %0, %12, %cst_9 {dimension_numbers = #tpu.dot_dimension_numbers<[1], [0], [0], [1], [0, 0, 1, 1], [], []>} : vector<8x16xf32>, vector<16x16xf32>, vector<8x16xf32> -> vector<8x16xf32>
    %14 = arith.index_cast %c1_i32 : i32 to index
    %c0_10 = arith.constant 0 : index
    %c0_11 = arith.constant 0 : index
    %15 = vector.load %arg6[%14, %c0_10, %c0_11] : memref<2x8x16xf32, #tpu.memory_space<vmem>>, vector<1x8x16xf32>
    %16 = vector.shape_cast %15 : vector<1x8x16xf32> to vector<8x16xf32>
    %17 = vector.shape_cast %13 : vector<8x16xf32> to vector<1x8x16xf32>
    tpu.vector_store %arg6[%14, %c0_10, %c0_11], %17 {strides = array<i32>} : memref<2x8x16xf32, #tpu.memory_space<vmem>>, vector<1x8x16xf32>,
    %c2_i32 = arith.constant 2 : i32
    %c0_12 = arith.constant 0 : index
    %c0_13 = arith.constant 0 : index
    %c0_14 = arith.constant 0 : index
    %18 = vector.load %arg6[%c0_12, %c0_13, %c0_14] : memref<2x8x16xf32, #tpu.memory_space<vmem>>, vector<2x8x16xf32>
    %19 = vector.shape_cast %18 : vector<2x8x16xf32> to vector<16x16xf32>
    %cst_15 = arith.constant dense<0.000000e+00> : vector<16x8xf32>
    %20 = tpu.matmul %19, %1, %cst_15 {dimension_numbers = #tpu.dot_dimension_numbers<[1], [0], [0], [1], [0, 0, 1, 1], [], []>} : vector<16x16xf32>, vector<16x8xf32>, vector<16x8xf32> -> vector<16x8xf32>
    %21 = vector.shape_cast %20 : vector<16x8xf32> to vector<2x8x8xf32>
    %c0_16 = arith.constant 0 : index
    %c0_17 = arith.constant 0 : index
    %c0_18 = arith.constant 0 : index
    %22 = vector.load %arg5[%c0_16, %c0_17, %c0_18] : memref<2x8x8xf32, #tpu.memory_space<vmem>>, vector<2x8x8xf32>
    tpu.vector_store %arg5[%c0_16, %c0_17, %c0_18], %21 {strides = array<i32>} : memref<2x8x8xf32, #tpu.memory_space<vmem>>, vector<2x8x8xf32>,
    return
  }
  func.func @transform_0(%arg0: i32, %arg1: i32) -> (i32, i32, i32) {
    %c0_i32 = arith.constant 0 : i32
    %c0_i32_0 = arith.constant 0 : i32
    %c0_i32_1 = arith.constant 0 : i32
    return %arg0, %c0_i32, %c0_i32_0 : i32, i32, i32
  }
  func.func @transform_1(%arg0: i32, %arg1: i32) -> (i32, i32) {
    %c0_i32 = arith.constant 0 : i32
    %c0_i32_0 = arith.constant 0 : i32
    return %arg1, %c0_i32 : i32, i32
  }
  func.func @transform_2(%arg0: i32, %arg1: i32) -> (i32, i32) {
    %c0_i32 = arith.constant 0 : i32
    %c0_i32_0 = arith.constant 0 : i32
    %c0_i32_1 = arith.constant 0 : i32
    return %c0_i32, %c0_i32_0 : i32, i32
  }
  func.func @transform_3(%arg0: i32, %arg1: i32) -> (i32, i32, i32) {
    %c0_i32 = arith.constant 0 : i32
    %c0_i32_0 = arith.constant 0 : i32
    return %arg0, %arg1, %c0_i32 : i32, i32, i32
  }
}

</mosaic_0001>

<llo_original>
// kernel: tpu_custom_call.1
$region0: #{tpu_custom_call.1}
  #allocation0 [shape = 'u32[]', space=smem, size = 0x4, offset = 0x4, fixed_abs, tag = 'smem constant byte address 0x4 - core index']
  #allocation1 [shape = 'u32[72,128]{1,0:T(1,128)}', space=vmem, size = 0x9000, scoped, tag = 'internal scratch']
  #allocation2 [shape = 'f32[2,8,16]{2,1,0:T(8,128)}', space=vmem, size = 0x2000, scoped, tag = 'scratch operand']
  %s0 = inlined_call_operand.hbm [shape: f32[8,16,16], index: 0, kind: input, shape index: {}]
  %s1 = inlined_call_operand.vmem [shape: f32[8,16], index: 1, kind: input, shape index: {}]
  %s2 = inlined_call_operand.vmem [shape: f32[16,8], index: 2, kind: input, shape index: {}]
  %s3 = inlined_call_operand.hbm [shape: f32[8,8,8], index: 3, kind: output, shape index: {}]
  %s4 = sld [smem:[#allocation0]]
  $region49: #{tpu_custom_call.1} parent=0
    _
  %s6 = ssub.s32 1, %s4
  %s7 = scalar_select 0, %s6, %s4
  $region1: #{tpu_custom_call.1} parent=0
    #allocation3 [shape = 'u8[32768]{0}', space=vmem, size = 0x8000, scoped, tag = 'input window, operand 0']
    #allocation4 [shape = 's32[2]{0}', space=sflag, size = 0x8, scoped, tag = 'scoped memory for tpu_custom_call.1']
    #allocation5 [shape = 's32[2]{0}', space=sflag, size = 0x8, scoped, tag = 'scoped memory for tpu_custom_call.1']
    #allocation6 [shape = 'u8[16384]{0}', space=vmem, size = 0x4000, scoped, tag = 'output window, operand 0']
    %8 = vsyncpa [#allocation4], 0
    %s9 = scalar_lea.sflag [#allocation4], 1
    %10 = vsyncpa %s9, 0
    %11 = vsyncpa [#allocation5], 0
    %s12 = scalar_lea.sflag [#allocation5], 1
    %13 = vsyncpa %s12, 0
    loop: start=0, step=1, limit=6
    $region2: #{tpu_custom_call.1} parent=1 // loop_pre_header
      _
    $region3: #{tpu_custom_call.1} parent=1 // loop_header
      %s15 = sphi 0, %s19
      %p16 = scmp.ge.s32.totalorder %s15, 6
      %s22 = sphi 0, %s34
      %s23 = sphi 0, %s30
      %s24 = sphi 0, %s22
      %s25 = sphi 0, %s23
      %s26 = sphi 0, %s24
      %s27 = sphi 0, %s25
      %s37 = sphi 0, %s39
      %s40 = sphi 0, %s37
      %s41 = sphi 0, %s40
      %s57 = sphi 0, %s41
      %s63 = sphi 0, %s65
      %s66 = sphi 0, %s63
      %s67 = sphi 0, %s66
      %s83 = sphi 0, %s67
      %s87 = sphi 0, %s87
      %s89 = sphi 0, %s87
      %s90 = sphi 0, %s89
      %s104 = sphi 0, %s90
      %s112 = sphi 0, %s114
      %s115 = sphi 0, %s112
      %s116 = sphi 0, %s115
      %s132 = sphi 0, %s116
    $region4: #{tpu_custom_call.1} parent=1 // loop_header_branch
      %18 = sbr.rel (%p16) target = $region8
    $region5: #{tpu_custom_call.1} parent=1 // loop_body
      %s20 = ssub.s32 %s15, 1
      %s21 = ssub.s32 %s15, 2
      %s28 = sadd.s32 1, %s23
      %p29 = scmp.ge.s32.totalorder %s28, 1
      %s30 = scalar_select %p29, 0, %s28
      %s31 = sadd.s32 1, %s22
      %s32 = scalar_select %p29, %s31, %s22
      %p33 = scmp.ge.s32.totalorder %s32, 4
      %s34 = scalar_select %p33, 0, %s32
      %s35 = ssub.s32 %s22, %s34
      %p36 = scmp.eq.s32.totalorder %s35, 0
      %s38 = sadd.s32 %s37, 1
      %s39 = scalar_select %p36, %s37, %s38
      %p42 = pneg %p36
      %p43 = scmp.eq.s32.totalorder %s15, 3
      %p44 = por %p42, %p43
      %p45 = scmp.ne.s32.totalorder %s37, %s40
      %p46 = scmp.eq.s32.totalorder %s15, 0
      %p47 = por %p45, %p46
      %p48 = scmp.ne.s32.totalorder %s37, %s40
      %p49 = scmp.eq.s32.totalorder %s20, 3
      %p50 = por %p48, %p49
      %p51 = scmp.ne.s32.totalorder %s40, %s41
      %p52 = scmp.eq.s32.totalorder %s20, 0
      %p53 = por %p51, %p52
      %p54 = scmp.ne.s32.totalorder %s40, %s41
      %p55 = scmp.eq.s32.totalorder %s21, 3
      %p56 = por %p54, %p55
      %p58 = scmp.ne.s32.totalorder %s41, %s57
      %p59 = scmp.eq.s32.totalorder %s21, 0
      %p60 = por %p58, %p59
      %s61 = ssub.s32 %s23, %s30
      %p62 = scmp.eq.s32.totalorder %s61, 0
      %s64 = sadd.s32 %s63, 1
      %s65 = scalar_select %p62, %s63, %s64
      %p68 = pneg %p62
      %p69 = scmp.eq.s32.totalorder %s15, 3
      %p70 = por %p68, %p69
      %p71 = scmp.ne.s32.totalorder %s63, %s66
      %p72 = scmp.eq.s32.totalorder %s15, 0
      %p73 = por %p71, %p72
      %p74 = scmp.ne.s32.totalorder %s63, %s66
      %p75 = scmp.eq.s32.totalorder %s20, 3
      %p76 = por %p74, %p75
      %p77 = scmp.ne.s32.totalorder %s66, %s67
      %p78 = scmp.eq.s32.totalorder %s20, 0
      %p79 = por %p77, %p78
      %p80 = scmp.ne.s32.totalorder %s66, %s67
      %p81 = scmp.eq.s32.totalorder %s21, 3
      %p82 = por %p80, %p81
      %p84 = scmp.ne.s32.totalorder %s67, %s83
      %p85 = scmp.eq.s32.totalorder %s21, 0
      %p86 = por %p84, %p85
      %s88 = sadd.s32 %s87, 1
      %p91 = scmp.eq.s32.totalorder %s15, 3
      %p92 = scmp.ne.s32.totalorder %s87, %s89
      %p93 = scmp.eq.s32.totalorder %s15, 0
      %p94 = por %p92, %p93
      %p95 = scmp.ne.s32.totalorder %s87, %s89
      %p96 = scmp.eq.s32.totalorder %s20, 3
      %p97 = por %p95, %p96
      %p98 = scmp.ne.s32.totalorder %s89, %s90
      %p99 = scmp.eq.s32.totalorder %s20, 0
      %p100 = por %p98, %p99
      %p101 = scmp.ne.s32.totalorder %s89, %s90
      %p102 = scmp.eq.s32.totalorder %s21, 3
      %p103 = por %p101, %p102
      %p105 = scmp.ne.s32.totalorder %s90, %s104
      %p106 = scmp.eq.s32.totalorder %s21, 0
      %p107 = por %p105, %p106
      %s108 = ssub.s32 %s22, %s34
      %s109 = ssub.s32 %s23, %s30
      %s110 = sor.u32 %s108, %s109
      %p111 = scmp.eq.s32.totalorder %s110, 0
      %s113 = sadd.s32 %s112, 1
      %s114 = scalar_select %p111, %s112, %s113
      %p117 = pneg %p111
      %p118 = scmp.eq.s32.totalorder %s15, 3
      %p119 = por %p117, %p118
      %p120 = scmp.ne.s32.totalorder %s112, %s115
      %p121 = scmp.eq.s32.totalorder %s15, 0
      %p122 = por %p120, %p121
      %p123 = scmp.ne.s32.totalorder %s112, %s115
      %p124 = scmp.eq.s32.totalorder %s20, 3
      %p125 = por %p123, %p124
      %p126 = scmp.ne.s32.totalorder %s115, %s116
      %p127 = scmp.eq.s32.totalorder %s20, 0
      %p128 = por %p126, %p127
      %p129 = scmp.ne.s32.totalorder %s115, %s116
      %p130 = scmp.eq.s32.totalorder %s21, 3
      %p131 = por %p129, %p130
      %p133 = scmp.ne.s32.totalorder %s116, %s132
      %p134 = scmp.eq.s32.totalorder %s21, 0
      %p135 = por %p133, %p134
      %p136 = scmp.le.s32.totalorder 1, %s15
      %p137 = scmp.lt.s32.totalorder %s15, 5
      %p138 = pnand %p136, %p137
      %p139 = pneg %p138
      // Predicated region
      $region9: #{tpu_custom_call.1} parent=5 // pred_check
        _
      $region10: #{tpu_custom_call.1} parent=5 // pred_check_branch
        %141 = sbr.rel (%p138) target = $region12
      $region11: #{tpu_custom_call.1} parent=5 // pred_region
        %s142 = ssub.s32 %s15, 1
        // Predicated region
        $region13: #{tpu_custom_call.1} parent=11 // pred_check
          %p143 = pneg %p79
        $region14: #{tpu_custom_call.1} parent=11 // pred_check_branch
          %145 = sbr.rel (%p143) target = $region16
        $region15: #{tpu_custom_call.1} parent=11 // pred_region
          %p146 = scmp.lt.s32.totalorder %s25, 0
          %s147 = scalar_select %p146, %s25, 0
          %s148 = smul.addr %s147, 8
          %s149 = scalar_lea.vmem %s1, %s148
        $region16: #{tpu_custom_call.1} parent=11 // pred_fallthru
          _
        // Predicated region
        $region17: #{tpu_custom_call.1} parent=11 // pred_check
          %p150 = pneg %p100
        $region18: #{tpu_custom_call.1} parent=11 // pred_check_branch
          %152 = sbr.rel (%p150) target = $region20
        $region19: #{tpu_custom_call.1} parent=11 // pred_region
          _
        $region20: #{tpu_custom_call.1} parent=11 // pred_fallthru
          _
      $region12: #{tpu_custom_call.1} parent=5 // pred_fallthru
        _
      %p153 = scmp.lt.s32.totalorder %s15, 4
      // Predicated region
      $region21: #{tpu_custom_call.1} parent=5 // pred_check
        %p154 = pneg %p153
      $region22: #{tpu_custom_call.1} parent=5 // pred_check_branch
        %156 = sbr.rel (%p154) target = $region24
      $region23: #{tpu_custom_call.1} parent=5 // pred_region
        // Predicated region
        $region25: #{tpu_custom_call.1} parent=23 // pred_check
          %p157 = pneg %p47
        $region26: #{tpu_custom_call.1} parent=23 // pred_check_branch
          %159 = sbr.rel (%p157) target = $region28
        $region27: #{tpu_custom_call.1} parent=23 // pred_region
          %s160 = sand.u32 %s37, 1
          %s161 = scalar_lea.sflag [#allocation4], %s160
          %s162 = sand.u32 %s37, 1
          %s163 = smul.addr %s162, 32
          %s164 = scalar_lea.vmem [#allocation3], %s163
          %s165 = smul.u32 2, %s22
          %167 = vsyncadd %s161, 0
          %s168 = smul.addr %s165, 2
          %s169 = smul.addr %s168, 8
          %s170 = scalar_lea.hbm %s0, %s169
          %s171 = sshll.u32 %s170, 4
          %s172 = int_to_ptr.hbm [resolvable:$true] %s171
          %s173 = sshll.u32 %s164, 4
          %s174 = int_to_ptr.vmem [resolvable:$true] %s173
          %179 = dma.hbm_to_vmem [thread:$0]  %s172, 512, %s174, %s161, 128, 128, 8
        $region28: #{tpu_custom_call.1} parent=23 // pred_fallthru
          _
      $region24: #{tpu_custom_call.1} parent=5 // pred_fallthru
        _
      %p180 = scmp.le.s32.totalorder 1, %s15
      %p181 = scmp.lt.s32.totalorder %s15, 5
      %p182 = pnand %p180, %p181
      %p183 = pneg %p182
      // Predicated region
      $region29: #{tpu_custom_call.1} parent=5 // pred_check
        _
      $region30: #{tpu_custom_call.1} parent=5 // pred_check_branch
        %185 = sbr.rel (%p182) target = $region32
      $region31: #{tpu_custom_call.1} parent=5 // pred_region
        %s186 = ssub.s32 %s15, 1
        %s187 = sand.u32 %s40, 1
        %s188 = scalar_lea.sflag [#allocation4], %s187
        %s189 = sand.u32 %s40, 1
        %s190 = smul.addr %s189, 32
        %s191 = scalar_lea.vmem [#allocation3], %s190
        // Predicated region
        $region33: #{tpu_custom_call.1} parent=31 // pred_check
          %p192 = pneg %p53
        $region34: #{tpu_custom_call.1} parent=31 // pred_check_branch
          %194 = sbr.rel (%p192) target = $region36
        $region35: #{tpu_custom_call.1} parent=31 // pred_region
          %196 = dma.done %s188, 512
        $region36: #{tpu_custom_call.1} parent=31 // pred_fallthru
          _
        %s197 = sand.u32 %s40, 1
        %s198 = scalar_lea.sflag [#allocation4], %s197
        %s199 = sand.u32 %s40, 1
        %s200 = smul.addr %s199, 32
        %s201 = scalar_lea.vmem [#allocation3], %s200
        %p202 = pneg %p53
        %p203 = pneg %p50
        %p204 = scmp.lt.s32.totalorder %s25, 0
        %s205 = scalar_select %p204, %s25, 0
        %s206 = smul.addr %s205, 8
        %s207 = scalar_lea.vmem %s1, %s206
        %p208 = pneg %p79
        %p209 = pneg %p76
        %p210 = pneg %p100
        %p211 = pneg %p97
        %p212 = pneg %p128
        %p213 = pneg %p125
        %s214 = sand.u32 %s115, 1
        %s215 = scalar_lea.sflag [#allocation5], %s214
        %s216 = sand.u32 %s115, 1
        %s217 = smul.addr %s216, 16
        %s218 = scalar_lea.vmem [#allocation6], %s217
        %s219 = smul.u32 2, %s24
        %p220 = scmp.lt.s32.totalorder %s25, 0
        %s221 = scalar_select %p220, %s25, 0
        %s222 = smul.addr %s221, 8
        %s223 = scalar_lea.vmem %s1, %s222
        %s224 = smul.u32 2, %s24
        %v225 = vld [vmem:[%s223] sm:$0xff]
        %v226 = vld [vmem:[%s2] sm:$0xff]
        %v227 = vld [vmem:[%s2 + $0x8] sm:$0xff]
        %v228 = vld [vmem:[%s191] sm:$0xff]
        %v229 = vld [vmem:[%s191 + $0x8] sm:$0xff]
        %vm230 = vcmask 130048
        %v232 = vsel %vm230, %v225, 0
        %234 = vmatpush.msra.mxu0 0.0
        %235 = vmatpush.msra.mxu0 0.0
        %236 = vmatpush.msra.mxu0 0.0
        %237 = vmatpush.msra.mxu0 0.0
        %238 = vmatpush.msra.mxu0 0.0
        %239 = vmatpush.msra.mxu0 0.0
        %240 = vmatpush.msra.mxu0 0.0
        %241 = vmatpush.msra.mxu0 0.0
        %242 = vmatpush.msra.mxu0 0.0
        %243 = vmatpush.msra.mxu0 0.0
        %244 = vmatpush.msra.mxu0 0.0
        %245 = vmatpush.msra.mxu0 0.0
        %246 = vmatpush.msra.mxu0 0.0
        %247 = vmatpush.msra.mxu0 0.0
        %248 = vmatpush.msra.mxu0 %v229
        %249 = vmatpush.msra.mxu0 %v228
        %250 = vmatmul.f32.gmra.mxu0 %v232
        %v251 = vpop.f32.mrf.mxu0
        %v252 = vadd.f32 0.0, %v251
        %253 = vdwg.mxu0
        %254 = vst.msk [vmem:[#allocation2] sm:$0xff] %vm230, %v252
        %s255 = scalar_lea.vmem %s191, 16 [#allocation3]
        %v256 = vld [vmem:[%s255] sm:$0xff]
        %v257 = vld [vmem:[%s255 + $0x8] sm:$0xff]
        %258 = vmatpush.msra.mxu0 0.0
        %259 = vmatpush.msra.mxu0 0.0
        %260 = vmatpush.msra.mxu0 0.0
        %261 = vmatpush.msra.mxu0 0.0
        %262 = vmatpush.msra.mxu0 0.0
        %263 = vmatpush.msra.mxu0 0.0
        %264 = vmatpush.msra.mxu0 0.0
        %265 = vmatpush.msra.mxu0 0.0
        %266 = vmatpush.msra.mxu0 0.0
        %267 = vmatpush.msra.mxu0 0.0
        %268 = vmatpush.msra.mxu0 0.0
        %269 = vmatpush.msra.mxu0 0.0
        %270 = vmatpush.msra.mxu0 0.0
        %271 = vmatpush.msra.mxu0 0.0
        %272 = vmatpush.msra.mxu0 %v257
        %273 = vmatpush.msra.mxu0 %v256
        %274 = vmatmul.f32.gmra.mxu0 %v232
        %v275 = vpop.f32.mrf.mxu0
        %v276 = vadd.f32 0.0, %v275
        %277 = vdwg.mxu0
        %s278 = scalar_lea.vmem [#allocation2], 8
        %279 = vst.msk [vmem:[%s278] sm:$0xff] %vm230, %v276
        %v280 = vld [vmem:[#allocation2] sm:$0xff]
        %v281 = vld [vmem:[#allocation2 + $0x8] sm:$0xff]
        %v283 = vsel %vm230, %v280, 0
        %v286 = vsel %vm230, %v281, 0
        %288 = vmatpush.msra.mxu0 0.0
        %289 = vmatpush.msra.mxu0 0.0
        %290 = vmatpush.msra.mxu0 0.0
        %291 = vmatpush.msra.mxu0 0.0
        %292 = vmatpush.msra.mxu0 0.0
        %293 = vmatpush.msra.mxu0 0.0
        %294 = vmatpush.msra.mxu0 0.0
        %295 = vmatpush.msra.mxu0 0.0
        %296 = vmatpush.msra.mxu0 0.0
        %297 = vmatpush.msra.mxu0 0.0
        %298 = vmatpush.msra.mxu0 0.0
        %299 = vmatpush.msra.mxu0 0.0
        %300 = vmatpush.msra.mxu0 0.0
        %301 = vmatpush.msra.mxu0 0.0
        %302 = vmatpush.msra.mxu0 %v227
        %303 = vmatpush.msra.mxu0 %v226
        %304 = vmatmul.f32.gmra.mxu0 %v283
        %v305 = vpop.f32.mrf.mxu0
        %v306 = vadd.f32 0.0, %v305
        %307 = vmatmul.f32.gmra.mxu0 %v286
        %v308 = vpop.f32.mrf.mxu0
        %v309 = vadd.f32 0.0, %v308
        %310 = vdwg.mxu0
        %vm311 = vcmask 64512
        %312 = vst.msk [vmem:[%s218] sm:$0xff] %vm311, %v306
        %313 = vst.msk [vmem:[%s218 + $0x8] sm:$0xff] %vm311, %v309
        %s314 = sand.u32 %s115, 1
        %s315 = scalar_lea.sflag [#allocation5], %s314
        %s316 = sand.u32 %s115, 1
        %s317 = smul.addr %s316, 16
        %s318 = scalar_lea.vmem [#allocation6], %s317
        // Predicated region
        $region37: #{tpu_custom_call.1} parent=31 // pred_check
          %p319 = pneg %p125
        $region38: #{tpu_custom_call.1} parent=31 // pred_check_branch
          %321 = sbr.rel (%p319) target = $region40
        $region39: #{tpu_custom_call.1} parent=31 // pred_region
          %s322 = smul.u32 2, %s24
          %324 = vsyncadd %s315, 0
          %s325 = sadd.s32 %s25, %s322
          %s326 = smul.addr %s325, 8
          %s327 = scalar_lea.hbm %s3, %s326
          %s328 = sshll.u32 %s318, 4
          %s329 = int_to_ptr.vmem [resolvable:$true] %s328
          %s330 = sshll.u32 %s327, 4
          %s331 = int_to_ptr.hbm [resolvable:$true] %s330
          %336 = dma.vmem_to_hbm [thread:$0]  %s329, 256, %s331, %s315, 128, 128, 8
        $region40: #{tpu_custom_call.1} parent=31 // pred_fallthru
          _
      $region32: #{tpu_custom_call.1} parent=5 // pred_fallthru
        _
      %p337 = scmp.le.s32.totalorder 2, %s15
      // Predicated region
      $region41: #{tpu_custom_call.1} parent=5 // pred_check
        %p338 = pneg %p337
      $region42: #{tpu_custom_call.1} parent=5 // pred_check_branch
        %340 = sbr.rel (%p338) target = $region44
      $region43: #{tpu_custom_call.1} parent=5 // pred_region
        %s341 = ssub.s32 %s15, 2
        // Predicated region
        $region45: #{tpu_custom_call.1} parent=43 // pred_check
          %p342 = pneg %p131
        $region46: #{tpu_custom_call.1} parent=43 // pred_check_branch
          %344 = sbr.rel (%p342) target = $region48
        $region47: #{tpu_custom_call.1} parent=43 // pred_region
          %s345 = sand.u32 %s116, 1
          %s346 = scalar_lea.sflag [#allocation5], %s345
          %s347 = sand.u32 %s116, 1
          %s348 = smul.addr %s347, 16
          %s349 = scalar_lea.vmem [#allocation6], %s348
          %351 = dma.done %s346, 256
        $region48: #{tpu_custom_call.1} parent=43 // pred_fallthru
          _
      $region44: #{tpu_custom_call.1} parent=5 // pred_fallthru
        _
    $region6: #{tpu_custom_call.1} parent=1 // loop_footer
      %s19 = sadd.s32 1, %s15
    $region7: #{tpu_custom_call.1} parent=1 // loop_footer_branch
      %14 = sbr.rel target = $region3
    $region8: #{tpu_custom_call.1} parent=1 // loop_exit
      _
    %352 = vsyncpa [#allocation4], 1
    %s353 = scalar_lea.sflag [#allocation4], 1
    %354 = vsyncpa %s353, 1
    %355 = vsyncpa [#allocation5], 1
    %s356 = scalar_lea.sflag [#allocation5], 1
    %357 = vsyncpa %s356, 1

</llo_original>
